<compile_context>
chip_gen: v5e
topology: v5e:2x2
jax: 0.10.0
libtpu: 0.0.40
codegen_flags: <defaults>
</compile_context>

<pallas_src>
import functools

import jax
import jax.numpy as jnp
from jax.experimental import pallas as pl
from jax.experimental.pallas import tpu as pltpu


def _phase_shuffle_kernel(shift_factor, k_ref, x_ref, o_ref):
    # x_ref / o_ref block: (c_tile, T) (batch dim squeezed); k_ref: (B,) int32 in SMEM.
    b = pl.program_id(0)
    k = k_ref[b]                      # shift in [-shift_factor, shift_factor]
    T = x_ref.shape[-1]

    x = x_ref[...]                    # native dtype, (c_tile, T)

    # Interior: out[:, t] = x[:, t - k] for in-range (t - k).  A lane rotation gives
    # x[:, (t - k) mod T]; only the <= shift_factor wrapped columns per side are wrong.
    rolled = pltpu.roll(x, shift=k % T, axis=1)

    t_idx = jax.lax.broadcasted_iota(jnp.int32, x.shape, 1)
    out = rolled

    # Reflect fix-up: at most shift_factor columns on each side (static, tiny loop).
    for d in range(1, shift_factor + 1):
        # Left edge (only when k >= d): out[:, k - d] = x[:, d]
        left_mask = (t_idx == (k - d)) & (k >= d)
        out = jnp.where(left_mask, x[:, d:d + 1], out)
        # Right edge (only when k <= -d): out[:, T - 1 + k + d] = x[:, T - 1 - d]
        right_mask = (t_idx == (T - 1 + k + d)) & (k <= -d)
        out = jnp.where(right_mask, x[:, T - 1 - d:T - d], out)

    o_ref[...] = out


def _choose_c_tile(C, T, itemsize, target_bytes=4 * 1024 * 1024):
    """Largest channel tile that (a) divides C, (b) satisfies the (8,128) sublane rule,
    and (c) keeps a block at ~a few MiB so double-buffered in+out pipeline buffers fit
    the scoped-VMEM budget on v5e/v6e/v7x."""
    if C % 8 != 0:
        return C  # full-channel block (legal: equals the full array dim)
    candidates = [d for d in range(8, C + 1, 8) if C % d == 0]
    fitting = [d for d in candidates if d * T * itemsize <= target_bytes]
    return max(fitting) if fitting else min(candidates)


def phase_shuffle(x, k_list, shift_factor):
    """x: (B, C, T), k_list: (B,) int32 shifts in [-shift_factor, shift_factor]."""
    B, C, T = x.shape
    assert 0 <= shift_factor < T
    itemsize = jnp.dtype(x.dtype).itemsize
    c_tile = _choose_c_tile(C, T, itemsize)
    kernel = functools.partial(_phase_shuffle_kernel, shift_factor)
    return pl.pallas_call(
        kernel,
        out_shape=jax.ShapeDtypeStruct((B, C, T), x.dtype),
        grid_spec=pltpu.PrefetchScalarGridSpec(
            num_scalar_prefetch=1,
            grid=(B, C // c_tile),
            in_specs=[pl.BlockSpec((pl.Squeezed(), c_tile, T),
                                   lambda b, c, k_ref: (b, c, 0))],
            out_specs=pl.BlockSpec((pl.Squeezed(), c_tile, T),
                                   lambda b, c, k_ref: (b, c, 0)),
        ),
        compiler_params=pltpu.CompilerParams(
            dimension_semantics=("parallel", "parallel"),
        ),
        cost_estimate=pl.CostEstimate(
            flops=0,
            transcendentals=0,
            bytes_accessed=2 * B * C * T * itemsize,
        ),
    )(k_list, x)


def phase_shuffle_module(x, shift_factor, key):
    """Full PhaseShuffle forward: draw per-sample shifts, then apply the kernel.

    Always returns (out, k_list) for a consistent API (k_list is all-zero when
    shift_factor == 0, in which case out is x unchanged)."""
    B = x.shape[0]
    if shift_factor == 0:
        return x, jnp.zeros((B,), jnp.int32)
    # TODO(synk): torch.Tensor.random_ RNG is replaced by jax.random.randint (host-side
    # of the kernel); the distribution (uniform over [-s, s]) matches the PyTorch module.
    k_list = jax.random.randint(
        key, (B,), minval=-shift_factor, maxval=shift_factor + 1, dtype=jnp.int32
    )
    return phase_shuffle(x, k_list, shift_factor), k_list


def _reference(x, k_list):
    """Pure-JAX reference (mirrors the PyTorch slice + reflect-pad semantics)."""
    B, C, T = x.shape
    t = jnp.arange(T)
    outs = []
    for b in range(B):
        k = int(k_list[b])
        idx = t - k
        idx = jnp.where(idx < 0, -idx, idx)
        idx = jnp.where(idx > T - 1, 2 * (T - 1) - idx, idx)
        outs.append(x[b][:, idx])
    return jnp.stack(outs, axis=0)


if __name__ == "__main__":
    key = jax.random.PRNGKey(0)
    kx, kk = jax.random.split(key)

    B, C, T = 5, 8, 128
    shift_factor = 2
    x = jax.random.normal(kx, (B, C, T), dtype=jnp.float32)

    # Direct kernel test with shifts covering both edges and zero (deterministic).
    k_list = jnp.array([-2, -1, 0, 1, 2], dtype=jnp.int32)
    out = jax.block_until_ready(phase_shuffle(x, k_list, shift_factor))
    ref = _reference(x, jax.device_get(k_list))
    assert out.shape == x.shape, (out.shape, x.shape)
    assert jnp.allclose(out, ref, atol=1e-6), "mismatch vs reference (explicit shifts)"

    # Full module path (random per-sample shifts).
    out2, k_list2 = phase_shuffle_module(x, shift_factor, kk)
    out2 = jax.block_until_ready(out2)
    ref2 = _reference(x, jax.device_get(k_list2))
    assert jnp.allclose(out2, ref2, atol=1e-6), "mismatch vs reference (module path)"

    print("KERNEL_OK")
</pallas_src>

<mosaic_0001>
module attributes {stable_mosaic.version = 11 : i64} {
  func.func @_phase_shuffle_kernel(%arg0: i32, %arg1: i32, %arg2: memref<5xi32, #tpu.memory_space<smem>>, %arg3: memref<1x8x128xf32, #tpu.memory_space<vmem>>, %arg4: memref<1x8x128xf32, #tpu.memory_space<vmem>>) attributes {dimension_semantics = [#tpu.dimension_semantics<parallel>, #tpu.dimension_semantics<parallel>], iteration_bounds = array<i64: 5, 1>, scalar_prefetch = 1 : i64, scratch_operands = 0 : i64, tpu.core_type = #tpu.core_type<tc>, window_params = [{transform_indices = @transform_0, window_bounds = array<i64: 1, 8, 128>}, {transform_indices = @transform_1, window_bounds = array<i64: 1, 8, 128>}]} {
    %0 = arith.index_cast %arg0 : i32 to index
    %1 = memref.load %arg2[%0] : memref<5xi32, #tpu.memory_space<smem>>
    %c0 = arith.constant 0 : index
    %c0_0 = arith.constant 0 : index
    %c0_1 = arith.constant 0 : index
    %2 = vector.load %arg3[%c0, %c0_0, %c0_1] : memref<1x8x128xf32, #tpu.memory_space<vmem>>, vector<1x8x128xf32>
    %3 = vector.shape_cast %2 : vector<1x8x128xf32> to vector<8x128xf32>
    %c128_i32 = arith.constant 128 : i32
    %c0_i32 = arith.constant 0 : i32
    %4 = arith.cmpi eq, %c128_i32, %c0_i32 : i32
    %c1_i32 = arith.constant 1 : i32
    %5 = arith.select %4, %c1_i32, %c128_i32 : i32
    %6 = arith.remsi %1, %5 : i32
    %c0_i32_2 = arith.constant 0 : i32
    %7 = arith.cmpi ne, %6, %c0_i32_2 : i32
    %c0_i32_3 = arith.constant 0 : i32
    %8 = arith.cmpi slt, %6, %c0_i32_3 : i32
    %c0_i32_4 = arith.constant 0 : i32
    %9 = arith.cmpi slt, %5, %c0_i32_4 : i32
    %10 = arith.xori %8, %9 : i1
    %11 = arith.andi %10, %7 : i1
    %12 = arith.addi %6, %5 : i32
    %13 = arith.select %11, %12, %6 : i32
    %14 = tpu.dynamic_rotate %3 by %13 dim 1 : vector<8x128xf32>, i32 -> vector<8x128xf32>
    %15 = tpu.iota {dimensions = array<i32: 1>} : vector<8x128xi32>
    %c1_i32_5 = arith.constant 1 : i32
    %16 = arith.subi %1, %c1_i32_5 : i32
    %17 = vector.broadcast %16 : i32 to vector<8x128xi32>
    %18 = arith.cmpi eq, %15, %17 : vector<8x128xi32>
    %c1_i32_6 = arith.constant 1 : i32
    %19 = arith.cmpi sge, %1, %c1_i32_6 : i32
    %20 = vector.broadcast %19 : i1 to vector<8x128xi1>
    %21 = arith.andi %18, %20 : vector<8x128xi1>
    %22 = vector.extract_strided_slice %3 {offsets = [0, 1], sizes = [8, 1], strides = [1, 1]} : vector<8x128xf32> to vector<8x1xf32>
    %23 = vector.shape_cast %22 : vector<8x1xf32> to vector<8x1xf32>
    %24 = vector.broadcast %23 : vector<8x1xf32> to vector<8x128xf32>
    %25 = arith.select %21, %24, %14 : vector<8x128xi1>, vector<8x128xf32>
    %c127_i32 = arith.constant 127 : i32
    %26 = arith.addi %c127_i32, %1 : i32
    %c1_i32_7 = arith.constant 1 : i32
    %27 = arith.addi %26, %c1_i32_7 : i32
    %28 = vector.broadcast %27 : i32 to vector<8x128xi32>
    %29 = arith.cmpi eq, %15, %28 : vector<8x128xi32>
    %c-1_i32 = arith.constant -1 : i32
    %30 = arith.cmpi sle, %1, %c-1_i32 : i32
    %31 = vector.broadcast %30 : i1 to vector<8x128xi1>
    %32 = arith.andi %29, %31 : vector<8x128xi1>
    %33 = vector.extract_strided_slice %3 {offsets = [0, 126], sizes = [8, 1], strides = [1, 1]} : vector<8x128xf32> to vector<8x1xf32>
    %34 = vector.shape_cast %33 : vector<8x1xf32> to vector<8x1xf32>
    %35 = vector.broadcast %34 : vector<8x1xf32> to vector<8x128xf32>
    %36 = arith.select %32, %35, %25 : vector<8x128xi1>, vector<8x128xf32>
    %c2_i32 = arith.constant 2 : i32
    %37 = arith.subi %1, %c2_i32 : i32
    %38 = vector.broadcast %37 : i32 to vector<8x128xi32>
    %39 = arith.cmpi eq, %15, %38 : vector<8x128xi32>
    %c2_i32_8 = arith.constant 2 : i32
    %40 = arith.cmpi sge, %1, %c2_i32_8 : i32
    %41 = vector.broadcast %40 : i1 to vector<8x128xi1>
    %42 = arith.andi %39, %41 : vector<8x128xi1>
    %43 = vector.extract_strided_slice %3 {offsets = [0, 2], sizes = [8, 1], strides = [1, 1]} : vector<8x128xf32> to vector<8x1xf32>
    %44 = vector.shape_cast %43 : vector<8x1xf32> to vector<8x1xf32>
    %45 = vector.broadcast %44 : vector<8x1xf32> to vector<8x128xf32>
    %46 = arith.select %42, %45, %36 : vector<8x128xi1>, vector<8x128xf32>
    %c127_i32_9 = arith.constant 127 : i32
    %47 = arith.addi %c127_i32_9, %1 : i32
    %c2_i32_10 = arith.constant 2 : i32
    %48 = arith.addi %47, %c2_i32_10 : i32
    %49 = vector.broadcast %48 : i32 to vector<8x128xi32>
    %50 = arith.cmpi eq, %15, %49 : vector<8x128xi32>
    %c-2_i32 = arith.constant -2 : i32
    %51 = arith.cmpi sle, %1, %c-2_i32 : i32
    %52 = vector.broadcast %51 : i1 to vector<8x128xi1>
    %53 = arith.andi %50, %52 : vector<8x128xi1>
    %54 = vector.extract_strided_slice %3 {offsets = [0, 125], sizes = [8, 1], strides = [1, 1]} : vector<8x128xf32> to vector<8x1xf32>
    %55 = vector.shape_cast %54 : vector<8x1xf32> to vector<8x1xf32>
    %56 = vector.broadcast %55 : vector<8x1xf32> to vector<8x128xf32>
    %57 = arith.select %53, %56, %46 : vector<8x128xi1>, vector<8x128xf32>
    %c0_11 = arith.constant 0 : index
    %c0_12 = arith.constant 0 : index
    %c0_13 = arith.constant 0 : index
    %58 = vector.load %arg4[%c0_11, %c0_12, %c0_13] : memref<1x8x128xf32, #tpu.memory_space<vmem>>, vector<1x8x128xf32>
    %59 = vector.shape_cast %58 : vector<1x8x128xf32> to vector<8x128xf32>
    %60 = vector.shape_cast %57 : vector<8x128xf32> to vector<1x8x128xf32>
    tpu.vector_store %arg4[%c0_11, %c0_12, %c0_13], %60 {strides = array<i32>} : memref<1x8x128xf32, #tpu.memory_space<vmem>>, vector<1x8x128xf32>,
    return
  }
  func.func @transform_0(%arg0: i32, %arg1: i32, %arg2: memref<5xi32, #tpu.memory_space<smem>>) -> (i32, i32, i32) {
    %c0_i32 = arith.constant 0 : i32
    %c0_i32_0 = arith.constant 0 : i32
    return %arg0, %arg1, %c0_i32 : i32, i32, i32
  }
  func.func @transform_1(%arg0: i32, %arg1: i32, %arg2: memref<5xi32, #tpu.memory_space<smem>>) -> (i32, i32, i32) {
    %c0_i32 = arith.constant 0 : i32
    %c0_i32_0 = arith.constant 0 : i32
    return %arg0, %arg1, %c0_i32 : i32, i32, i32
  }
}

</mosaic_0001>

<llo_original>
// kernel: tpu_custom_call.1
$region0: #{tpu_custom_call.1}
  #allocation0 [shape = 'u32[]', space=smem, size = 0x4, offset = 0x4, fixed_abs, tag = 'smem constant byte address 0x4 - core index']
  #allocation1 [shape = 'u32[72,128]{1,0:T(1,128)}', space=vmem, size = 0x9000, scoped, tag = 'internal scratch']
  #allocation2 [shape = 's32[1]{0}', space=sflag, size = 0x4, scoped, tag = 'scoped memory for tpu_custom_call.1']
  #allocation3 [shape = 'u8[512]{0}', space=smem, size = 0x200, scoped, tag = 'prefetched SMEM operand 0']
  %s0 = inlined_call_operand.hbm [shape: s32[5], index: 0, kind: input, shape index: {}]
  %s1 = inlined_call_operand.hbm [shape: f32[5,8,128], index: 1, kind: input, shape index: {}]
  %s2 = inlined_call_operand.hbm [shape: f32[5,8,128], index: 2, kind: output, shape index: {}]
  %s3 = sld [smem:[#allocation0]]
  $region41: #{tpu_custom_call.1} parent=0
    _
  %s5 = ssub.s32 1, %s3
  %s6 = scalar_select 0, %s5, %s3
  %s8 = sshll.u32 %s0, 4
  %s9 = int_to_ptr.hbm [resolvable:$true] %s8
  %11 = dma.hbm_to_smem %s9, 16, [#allocation3], [#allocation2]
  %13 = dma.done [#allocation2], 16
  %14 = sfence
  $region1: #{tpu_custom_call.1} parent=0
    #allocation4 [shape = 'u8[8192]{0}', space=vmem, size = 0x2000, scoped, tag = 'input window, operand 1']
    #allocation5 [shape = 's32[2]{0}', space=sflag, size = 0x8, scoped, tag = 'scoped memory for tpu_custom_call.1']
    #allocation6 [shape = 's32[2]{0}', space=sflag, size = 0x8, scoped, tag = 'scoped memory for tpu_custom_call.1']
    #allocation7 [shape = 'u8[8192]{0}', space=vmem, size = 0x2000, scoped, tag = 'output window, operand 0']
    %15 = vsyncpa [#allocation5], 0
    %s16 = scalar_lea.sflag [#allocation5], 1
    %17 = vsyncpa %s16, 0
    %18 = vsyncpa [#allocation6], 0
    %s19 = scalar_lea.sflag [#allocation6], 1
    %20 = vsyncpa %s19, 0
    loop: start=0, step=1, limit=7
    $region2: #{tpu_custom_call.1} parent=1 // loop_pre_header
      _
    $region3: #{tpu_custom_call.1} parent=1 // loop_header
      %s22 = sphi 0, %s26
      %p23 = scmp.ge.s32.totalorder %s22, 7
      %s29 = sphi 0, %s41
      %s30 = sphi 0, %s37
      %s31 = sphi 0, %s29
      %s32 = sphi 0, %s30
      %s33 = sphi 0, %s31
      %s34 = sphi 0, %s32
      %s46 = sphi 0, %s48
      %s49 = sphi 0, %s46
      %s50 = sphi 0, %s49
      %s66 = sphi 0, %s50
      %s74 = sphi 0, %s76
      %s77 = sphi 0, %s74
      %s78 = sphi 0, %s77
      %s94 = sphi 0, %s78
    $region4: #{tpu_custom_call.1} parent=1 // loop_header_branch
      %25 = sbr.rel (%p23) target = $region8
    $region5: #{tpu_custom_call.1} parent=1 // loop_body
      %s27 = ssub.s32 %s22, 1
      %s28 = ssub.s32 %s22, 2
      %s35 = sadd.s32 1, %s30
      %p36 = scmp.ge.s32.totalorder %s35, 1
      %s37 = scalar_select %p36, 0, %s35
      %s38 = sadd.s32 1, %s29
      %s39 = scalar_select %p36, %s38, %s29
      %p40 = scmp.ge.s32.totalorder %s39, 5
      %s41 = scalar_select %p40, 0, %s39
      %s42 = ssub.s32 %s29, %s41
      %s43 = ssub.s32 %s30, %s37
      %s44 = sor.u32 %s42, %s43
      %p45 = scmp.eq.s32.totalorder %s44, 0
      %s47 = sadd.s32 %s46, 1
      %s48 = scalar_select %p45, %s46, %s47
      %p51 = pneg %p45
      %p52 = scmp.eq.s32.totalorder %s22, 4
      %p53 = por %p51, %p52
      %p54 = scmp.ne.s32.totalorder %s46, %s49
      %p55 = scmp.eq.s32.totalorder %s22, 0
      %p56 = por %p54, %p55
      %p57 = scmp.ne.s32.totalorder %s46, %s49
      %p58 = scmp.eq.s32.totalorder %s27, 4
      %p59 = por %p57, %p58
      %p60 = scmp.ne.s32.totalorder %s49, %s50
      %p61 = scmp.eq.s32.totalorder %s27, 0
      %p62 = por %p60, %p61
      %p63 = scmp.ne.s32.totalorder %s49, %s50
      %p64 = scmp.eq.s32.totalorder %s28, 4
      %p65 = por %p63, %p64
      %p67 = scmp.ne.s32.totalorder %s50, %s66
      %p68 = scmp.eq.s32.totalorder %s28, 0
      %p69 = por %p67, %p68
      %s70 = ssub.s32 %s29, %s41
      %s71 = ssub.s32 %s30, %s37
      %s72 = sor.u32 %s70, %s71
      %p73 = scmp.eq.s32.totalorder %s72, 0
      %s75 = sadd.s32 %s74, 1
      %s76 = scalar_select %p73, %s74, %s75
      %p79 = pneg %p73
      %p80 = scmp.eq.s32.totalorder %s22, 4
      %p81 = por %p79, %p80
      %p82 = scmp.ne.s32.totalorder %s74, %s77
      %p83 = scmp.eq.s32.totalorder %s22, 0
      %p84 = por %p82, %p83
      %p85 = scmp.ne.s32.totalorder %s74, %s77
      %p86 = scmp.eq.s32.totalorder %s27, 4
      %p87 = por %p85, %p86
      %p88 = scmp.ne.s32.totalorder %s77, %s78
      %p89 = scmp.eq.s32.totalorder %s27, 0
      %p90 = por %p88, %p89
      %p91 = scmp.ne.s32.totalorder %s77, %s78
      %p92 = scmp.eq.s32.totalorder %s28, 4
      %p93 = por %p91, %p92
      %p95 = scmp.ne.s32.totalorder %s78, %s94
      %p96 = scmp.eq.s32.totalorder %s28, 0
      %p97 = por %p95, %p96
      %p98 = scmp.le.s32.totalorder 1, %s22
      %p99 = scmp.lt.s32.totalorder %s22, 6
      %p100 = pnand %p98, %p99
      %p101 = pneg %p100
      // Predicated region
      $region9: #{tpu_custom_call.1} parent=5 // pred_check
        _
      $region10: #{tpu_custom_call.1} parent=5 // pred_check_branch
        %103 = sbr.rel (%p100) target = $region12
      $region11: #{tpu_custom_call.1} parent=5 // pred_region
        %s104 = ssub.s32 %s22, 1
      $region12: #{tpu_custom_call.1} parent=5 // pred_fallthru
        _
      %p105 = scmp.lt.s32.totalorder %s22, 5
      // Predicated region
      $region13: #{tpu_custom_call.1} parent=5 // pred_check
        %p106 = pneg %p105
      $region14: #{tpu_custom_call.1} parent=5 // pred_check_branch
        %108 = sbr.rel (%p106) target = $region16
      $region15: #{tpu_custom_call.1} parent=5 // pred_region
        // Predicated region
        $region17: #{tpu_custom_call.1} parent=15 // pred_check
          %p109 = pneg %p56
        $region18: #{tpu_custom_call.1} parent=15 // pred_check_branch
          %111 = sbr.rel (%p109) target = $region20
        $region19: #{tpu_custom_call.1} parent=15 // pred_region
          %s112 = sand.u32 %s46, 1
          %s113 = scalar_lea.sflag [#allocation5], %s112
          %s114 = sand.u32 %s46, 1
          %s115 = smul.addr %s114, 8
          %s116 = scalar_lea.vmem [#allocation4], %s115
          %118 = vsyncadd %s113, 0
          %s119 = sadd.s32 %s30, %s29
          %s120 = smul.addr %s119, 8
          %s121 = scalar_lea.hbm %s1, %s120
          %s123 = sshll.u32 %s121, 4
          %s124 = int_to_ptr.hbm [resolvable:$true] %s123
          %s125 = sshll.u32 %s116, 4
          %s126 = int_to_ptr.vmem [resolvable:$true] %s125
          %128 = dma.hbm_to_vmem [thread:$0]  %s124, 128, %s126, %s113
        $region20: #{tpu_custom_call.1} parent=15 // pred_fallthru
          _
      $region16: #{tpu_custom_call.1} parent=5 // pred_fallthru
        _
      %p129 = scmp.le.s32.totalorder 1, %s22
      %p130 = scmp.lt.s32.totalorder %s22, 6
      %p131 = pnand %p129, %p130
      %p132 = pneg %p131
      // Predicated region
      $region21: #{tpu_custom_call.1} parent=5 // pred_check
        _
      $region22: #{tpu_custom_call.1} parent=5 // pred_check_branch
        %134 = sbr.rel (%p131) target = $region24
      $region23: #{tpu_custom_call.1} parent=5 // pred_region
        %s135 = ssub.s32 %s22, 1
        %s136 = sand.u32 %s49, 1
        %s137 = scalar_lea.sflag [#allocation5], %s136
        %s138 = sand.u32 %s49, 1
        %s139 = smul.addr %s138, 8
        %s140 = scalar_lea.vmem [#allocation4], %s139
        // Predicated region
        $region25: #{tpu_custom_call.1} parent=23 // pred_check
          %p141 = pneg %p62
        $region26: #{tpu_custom_call.1} parent=23 // pred_check_branch
          %143 = sbr.rel (%p141) target = $region28
        $region27: #{tpu_custom_call.1} parent=23 // pred_region
          %145 = dma.done %s137, 128
        $region28: #{tpu_custom_call.1} parent=23 // pred_fallthru
          _
        %s146 = sand.u32 %s49, 1
        %s147 = scalar_lea.sflag [#allocation5], %s146
        %s148 = sand.u32 %s49, 1
        %s149 = smul.addr %s148, 8
        %s150 = scalar_lea.vmem [#allocation4], %s149
        %p151 = pneg %p62
        %p152 = pneg %p59
        %p153 = pneg %p90
        %p154 = pneg %p87
        %s155 = sand.u32 %s77, 1
        %s156 = scalar_lea.sflag [#allocation6], %s155
        %s157 = sand.u32 %s77, 1
        %s158 = smul.addr %s157, 8
        %s159 = scalar_lea.vmem [#allocation7], %s158
        %s160 = sld [smem:[#allocation3 + %s31]]
        %v161 = vld [vmem:[%s140] sm:$0xff]
        %p162 = scmp.lt.s32.totalorder %s160, 0
        %s163 = ssub.s32 0, %s160
        %s164 = scalar_select %p162, %s163, %s160
        %s165 = sand.u32 %s164, 127
        %s166 = ssub.s32 0, %s165
        %s167 = scalar_select %p162, %s166, %s165
        %p168 = scmp.ne.s32.totalorder %s167, 0
        %p169 = scmp.lt.s32.totalorder %s167, 0
        %p170 = pnand %p169, %p168
        %p171 = pneg %p170
        %s172 = sadd.s32 %s167, 128
        %s173 = scalar_select %p171, %s172, %s167
        %s174 = sand.u32 %s173, 127
        %s175 = sand.u32 %s174, 127
        %176 = vrot.lane.b32.xlu0 %v161, %s175
        %v177 = vpop.permute.xlu0 %176
        %v178 = vlaneseq
        %v179 = vand.u32 %v178, 127
        %s180 = ssub.s32 %s160, 1
        %v181 = vstv %s180
        %vm182 = vcmp.eq.s32.totalorder %v179, %v181
        %p183 = scmp.ge.s32.totalorder %s160, 1
        %s184 = scalar_select %p183, 1, 0
        %v185 = vstv %s184
        %vm186 = vcmp.eq.s32.totalorder %v185, 1
        %vm187 = vmand %vm182, %vm186
        %189 = vset.pattern.permute.xlu0 1
        %190 = vperm.xlu0 %189, %v161
        %v191 = vpop.permute.xlu0 %190
        %v193 = vsel %vm187, %v191, %v177
        %s194 = sadd.s32 %s160, 128
        %v195 = vstv %s194
        %vm196 = vcmp.eq.s32.totalorder %v179, %v195
        %p197 = scmp.le.s32.totalorder %s160, 4294967295
        %s198 = scalar_select %p197, 1, 0
        %v199 = vstv %s198
        %vm200 = vcmp.eq.s32.totalorder %v199, 1
        %vm201 = vmand %vm196, %vm200
        %202 = vset.pattern.permute.xlu0 126
        %203 = vperm.xlu0 %202, %v161
        %v204 = vpop.permute.xlu0 %203
        %v206 = vsel %vm201, %v204, %v193
        %s207 = ssub.s32 %s160, 2
        %v208 = vstv %s207
        %vm209 = vcmp.eq.s32.totalorder %v179, %v208
        %p210 = scmp.ge.s32.totalorder %s160, 2
        %s211 = scalar_select %p210, 1, 0
        %v212 = vstv %s211
        %vm213 = vcmp.eq.s32.totalorder %v212, 1
        %vm214 = vmand %vm209, %vm213
        %215 = vset.pattern.permute.xlu0 2
        %216 = vperm.xlu0 %215, %v161
        %v217 = vpop.permute.xlu0 %216
        %v219 = vsel %vm214, %v217, %v206
        %s220 = sadd.s32 %s160, 129
        %v221 = vstv %s220
        %vm222 = vcmp.eq.s32.totalorder %v179, %v221
        %p223 = scmp.le.s32.totalorder %s160, 4294967294
        %s224 = scalar_select %p223, 1, 0
        %v225 = vstv %s224
        %vm226 = vcmp.eq.s32.totalorder %v225, 1
        %vm227 = vmand %vm222, %vm226
        %228 = vset.pattern.permute.xlu0 125
        %229 = vperm.xlu0 %228, %v161
        %v230 = vpop.permute.xlu0 %229
        %v232 = vsel %vm227, %v230, %v219
        %233 = vst [vmem:[%s159] sm:$0xff] %v232
        %s234 = sand.u32 %s77, 1
        %s235 = scalar_lea.sflag [#allocation6], %s234
        %s236 = sand.u32 %s77, 1
        %s237 = smul.addr %s236, 8
        %s238 = scalar_lea.vmem [#allocation7], %s237
        // Predicated region
        $region29: #{tpu_custom_call.1} parent=23 // pred_check
          %p239 = pneg %p87
        $region30: #{tpu_custom_call.1} parent=23 // pred_check_branch
          %241 = sbr.rel (%p239) target = $region32
        $region31: #{tpu_custom_call.1} parent=23 // pred_region
          %243 = vsyncadd %s235, 0
          %s244 = sadd.s32 %s32, %s31
          %s245 = smul.addr %s244, 8
          %s246 = scalar_lea.hbm %s2, %s245
          %s248 = sshll.u32 %s238, 4
          %s249 = int_to_ptr.vmem [resolvable:$true] %s248
          %s250 = sshll.u32 %s246, 4
          %s251 = int_to_ptr.hbm [resolvable:$true] %s250
          %253 = dma.vmem_to_hbm [thread:$0]  %s249, 128, %s251, %s235
        $region32: #{tpu_custom_call.1} parent=23 // pred_fallthru
          _
      $region24: #{tpu_custom_call.1} parent=5 // pred_fallthru
        _
      %p254 = scmp.le.s32.totalorder 2, %s22
      // Predicated region
      $region33: #{tpu_custom_call.1} parent=5 // pred_check
        %p255 = pneg %p254
      $region34: #{tpu_custom_call.1} parent=5 // pred_check_branch
        %257 = sbr.rel (%p255) target = $region36
      $region35: #{tpu_custom_call.1} parent=5 // pred_region
        %s258 = ssub.s32 %s22, 2
        // Predicated region
        $region37: #{tpu_custom_call.1} parent=35 // pred_check
          %p259 = pneg %p93
        $region38: #{tpu_custom_call.1} parent=35 // pred_check_branch
          %261 = sbr.rel (%p259) target = $region40
        $region39: #{tpu_custom_call.1} parent=35 // pred_region
          %s262 = sand.u32 %s78, 1
          %s263 = scalar_lea.sflag [#allocation6], %s262
          %s264 = sand.u32 %s78, 1
          %s265 = smul.addr %s264, 8
          %s266 = scalar_lea.vmem [#allocation7], %s265
          %268 = dma.done %s263, 128
        $region40: #{tpu_custom_call.1} parent=35 // pred_fallthru
          _
      $region36: #{tpu_custom_call.1} parent=5 // pred_fallthru
        _
    $region6: #{tpu_custom_call.1} parent=1 // loop_footer
      %s26 = sadd.s32 1, %s22
    $region7: #{tpu_custom_call.1} parent=1 // loop_footer_branch
      %21 = sbr.rel target = $region3
    $region8: #{tpu_custom_call.1} parent=1 // loop_exit
      _
    %269 = vsyncpa [#allocation5], 1
    %s270 = scalar_lea.sflag [#allocation5], 1
    %271 = vsyncpa %s270, 1
    %272 = vsyncpa [#allocation6], 1
    %s273 = scalar_lea.sflag [#allocation6], 1
    %274 = vsyncpa %s273, 1

</llo_original>
